<compile_context>
chip_gen: v7x
topology: tpu7x:2x2x1
jax: 0.10.0
libtpu: 0.0.40
codegen_flags: <defaults>
</compile_context>

<pallas_src>
import functools

import numpy as np
import jax
import jax.numpy as jnp
from jax.experimental import pallas as pl
from jax.experimental.pallas import tpu as pltpu

EPS = 1e-8


def _round_up(x, m):
    return ((x + m - 1) // m) * m


# ---------------------------------------------------------------------------
# Deterministic parameter construction (mirrors SpectralFeaturesTF.build()).
# ---------------------------------------------------------------------------
def hz2mel(hz):
    return 2595 * np.log10(1 + hz / 700.0)


def get_filterbanks(low_freq=20, high_freq=7600, nfilt=80, nfft=256, samplerate=16000):
    lowmel = hz2mel(low_freq)
    highmel = hz2mel(high_freq)
    melpoints = np.linspace(lowmel, highmel, nfilt + 2)
    lower_edge_mel = melpoints[:-2].reshape(1, -1)
    center_mel = melpoints[1:-1].reshape(1, -1)
    upper_edge_mel = melpoints[2:].reshape(1, -1)
    spectrogram_bins_mel = hz2mel(np.linspace(0, samplerate // 2, nfft))[1:].reshape(-1, 1)
    lower_slopes = (spectrogram_bins_mel - lower_edge_mel) / (center_mel - lower_edge_mel)
    upper_slopes = (upper_edge_mel - spectrogram_bins_mel) / (upper_edge_mel - center_mel)
    mel_weights_matrix = np.maximum(0.0, np.minimum(lower_slopes, upper_slopes))
    # shape (nfft, nfilt): rows = linear freq bins, cols = mel filters
    return np.vstack([np.zeros((1, nfilt)), mel_weights_matrix]).astype("float32")


def build_params(win_length=400, n_fft=512, n_mels=80,
                 sample_rate=16000, f_min=20, f_max=7600):
    M = win_length
    # 'hamming' window (scipy windows.hamming, sym=True)
    window = 0.54 - 0.46 * np.cos(2 * np.pi * np.arange(M) / (M - 1))
    n = np.arange(M)[:, None]              # position inside frame
    f = np.arange(n_fft // 2)[None, :]     # frequency bin
    ang = 2 * np.pi * n * f / n_fft
    real_k = (np.cos(ang) * window[:, None]).astype(np.float32)   # (win, n_fft//2)
    imag_k = (np.sin(ang) * window[:, None]).astype(np.float32)   # (win, n_fft//2)
    mel_w = get_filterbanks(low_freq=f_min, high_freq=f_max, nfilt=n_mels,
                            nfft=n_fft // 2, samplerate=sample_rate)  # (n_fft//2, n_mels)
    return real_k, imag_k, mel_w


# ---------------------------------------------------------------------------
# Pallas kernel: fused windowed-DFT -> power -> mel -> log, one row-tile at a time.
# ---------------------------------------------------------------------------
def melbanks_kernel(frames_ref, dft_ref, mw_ref, out_ref, *, n_freq, compute_dtype):
    # frames_ref: (TT, K_pad)   dft_ref: (K_pad, 2*n_freq)   mw_ref: (n_freq, mels_pad)
    fr = frames_ref[...]
    spec = jnp.dot(fr, dft_ref[...], preferred_element_type=jnp.float32)  # (TT, 2*n_freq)
    re = spec[:, :n_freq]
    im = spec[:, n_freq:]

    power = jnp.clip(re * re + im * im, EPS, 1.0 / EPS)                   # (TT, n_freq)

    mel = jnp.dot(power.astype(compute_dtype), mw_ref[...],
                  preferred_element_type=jnp.float32)                     # (TT, mels_pad)
    mel = jnp.clip(mel, EPS, 1.0 / EPS)

    # TFMelBanks: log(mel + eps); the per-(batch,mel) time-mean is subtracted outside.
    out_ref[...] = jnp.log(mel + EPS)


# ---------------------------------------------------------------------------
# Wrapper: pre-emphasis + reshape-based framing, pallas_call, tiny epilogue.
# ---------------------------------------------------------------------------
@functools.partial(
    jax.jit,
    static_argnames=("win_length", "hop_length", "n_fft", "n_mels", "sample_rate",
                     "f_min", "f_max", "do_preemph", "preemph_coef",
                     "time_tile", "use_bf16"))
def tf_melbanks(x, *, win_length=400, hop_length=160, n_fft=512, n_mels=80,
                sample_rate=16000, f_min=20, f_max=7600,
                do_preemph=True, preemph_coef=0.97,
                time_tile=256, use_bf16=False):
    xdtype = x.dtype
    x = x.astype(jnp.float32)
    B, T = x.shape

    if do_preemph:
        # F.pad(x,(1,0),'reflect') + conv1d([-coef,1]) => y[t] = x[t] - coef*x[t-1], x[-1]:=x[1]
        left = jnp.concatenate([x[:, 1:2], x[:, :-1]], axis=1)
        x = x - preemph_coef * left

    pad = hop_length // 2
    n_time = (T + 2 * pad - win_length) // hop_length + 1

    # Reshape-based framing (no gather HLO): chunk the padded signal at hop
    # granularity; frame t = [chunk t | chunk t+1 | first (win-2*hop) of chunk t+2].
    n_span = -(-win_length // hop_length)          # chunks touched per frame (3)
    n_chunks = n_time + n_span - 1
    target_len = n_chunks * hop_length
    cur_len = T + 2 * pad
    xp = jnp.pad(x, ((0, 0), (pad, pad + max(0, target_len - cur_len))))
    xp = xp[:, :target_len]
    chunks = xp.reshape(B, n_chunks, hop_length)
    parts = []
    for s in range(n_span):
        width = min(hop_length, win_length - s * hop_length)
        parts.append(chunks[:, s:s + n_time, :width])
    frames = jnp.concatenate(parts, axis=-1)       # (B, n_time, win_length)

    # MXU / lane alignment: pad contraction dim to 512 and mel dim to 128.
    n_freq = n_fft // 2
    k_pad = _round_up(win_length, 128)             # 400 -> 512
    mels_pad = _round_up(n_mels, 128)              # 80  -> 128

    # Flatten (B, n_time) into one row axis and tile it.
    R = B * n_time
    tt = min(time_tile, _round_up(R, 8))
    r_pad = _round_up(R, tt)

    compute_dtype = jnp.bfloat16 if use_bf16 else jnp.float32

    frames_flat = frames.reshape(R, win_length)
    frames_flat = jnp.pad(frames_flat, ((0, r_pad - R), (0, k_pad - win_length)))
    frames_flat = frames_flat.astype(compute_dtype)

    real_k, imag_k, mel_w = build_params(win_length, n_fft, n_mels,
                                         sample_rate, f_min, f_max)
    dft = np.zeros((k_pad, 2 * n_freq), np.float32)      # fused [real | imag], zero rows 400..511
    dft[:win_length, :n_freq] = real_k
    dft[:win_length, n_freq:] = imag_k
    mw = np.zeros((n_freq, mels_pad), np.float32)        # zero columns 80..127
    mw[:, :n_mels] = mel_w
    dft = jnp.asarray(dft, dtype=compute_dtype)
    mw = jnp.asarray(mw, dtype=compute_dtype)

    kernel = functools.partial(melbanks_kernel, n_freq=n_freq,
                               compute_dtype=compute_dtype)

    out = pl.pallas_call(
        kernel,
        out_shape=jax.ShapeDtypeStruct((r_pad, mels_pad), jnp.float32),
        grid=(r_pad // tt,),
        in_specs=[
            pl.BlockSpec((tt, k_pad), lambda r: (r, 0)),
            pl.BlockSpec((k_pad, 2 * n_freq), lambda r: (0, 0)),
            pl.BlockSpec((n_freq, mels_pad), lambda r: (0, 0)),
        ],
        out_specs=pl.BlockSpec((tt, mels_pad), lambda r: (r, 0)),
        compiler_params=pltpu.CompilerParams(
            dimension_semantics=("parallel",)),
    )(frames_flat, dft, mw)

    # Tiny epilogue on the (B, n_time, n_mels)-sized output:
    # slice off padding, subtract per-(batch, mel) mean over time, go to NCT layout.
    logmel = out[:R, :n_mels].reshape(B, n_time, n_mels)
    logmel = logmel - jnp.mean(logmel, axis=1, keepdims=True)
    out_nct = jnp.transpose(logmel, (0, 2, 1))           # (B, n_mels, n_time)
    return out_nct.astype(xdtype)


# TODO(synk): FbankAug (random spec-augment masks) only runs in training mode and
# do_spec_aug defaults to False, so it is intentionally not implemented here.


# ---------------------------------------------------------------------------
# Pure-JAX reference (same math, straightforward einsums) for validation.
# ---------------------------------------------------------------------------
def melbanks_reference(x, *, win_length=400, hop_length=160, n_fft=512, n_mels=80,
                       sample_rate=16000, f_min=20, f_max=7600,
                       do_preemph=True, preemph_coef=0.97):
    x = x.astype(jnp.float32)
    B, T = x.shape
    if do_preemph:
        left = jnp.concatenate([x[:, 1:2], x[:, :-1]], axis=1)
        x = x - preemph_coef * left
    pad = hop_length // 2
    xp = jnp.pad(x, ((0, 0), (pad, pad)))
    n_time = (T + 2 * pad - win_length) // hop_length + 1
    idx = np.arange(n_time)[:, None] * hop_length + np.arange(win_length)[None, :]
    frames = xp[:, idx]                                  # (B, n_time, win)
    rk, ik, mw = build_params(win_length, n_fft, n_mels, sample_rate, f_min, f_max)
    hi = jax.lax.Precision.HIGHEST
    re = jnp.einsum('btw,wf->btf', frames, rk, precision=hi)
    im = jnp.einsum('btw,wf->btf', frames, ik, precision=hi)
    power = jnp.clip(re * re + im * im, EPS, 1.0 / EPS)
    mel = jnp.clip(jnp.einsum('btf,fm->btm', power, mw, precision=hi), EPS, 1.0 / EPS)
    logm = jnp.log(mel + EPS)
    logm = logm - jnp.mean(logm, axis=1, keepdims=True)
    return jnp.transpose(logm, (0, 2, 1))


if __name__ == "__main__":
    key = jax.random.PRNGKey(0)
    B, T = 2, 1600  # 0.1s of 16kHz audio
    x = jax.random.normal(key, (B, T), dtype=jnp.float32)

    y = tf_melbanks(x)
    y = jax.block_until_ready(y)

    n_time = (T + 160 - 400) // 160 + 1
    assert y.shape == (B, 80, n_time), y.shape
    assert y.dtype == jnp.float32
    assert bool(jnp.all(jnp.isfinite(y)))
    # per-(batch, mel) time-mean should be ~0 after mean subtraction
    assert float(jnp.max(jnp.abs(jnp.mean(y, axis=-1)))) < 1e-4

    # numerical check against a pure-JAX reference of the same pipeline
    y_ref = jax.block_until_ready(melbanks_reference(x))
    err = float(jnp.max(jnp.abs(y - y_ref)))
    assert err < 5e-3, f"max abs err vs reference: {err}"

    print("KERNEL_OK")
</pallas_src>

<mosaic_0001>
module attributes {stable_mosaic.version = 11 : i64} {
  func.func @melbanks_kernel(%arg0: i32, %arg1: memref<24x512xf32, #tpu.memory_space<vmem>>, %arg2: memref<512x512xf32, #tpu.memory_space<vmem>>, %arg3: memref<256x128xf32, #tpu.memory_space<vmem>>, %arg4: memref<24x128xf32, #tpu.memory_space<vmem>>) attributes {dimension_semantics = [#tpu.dimension_semantics<parallel>], iteration_bounds = array<i64: 1>, scalar_prefetch = 0 : i64, scratch_operands = 0 : i64, tpu.core_type = #tpu.core_type<tc>, window_params = [{transform_indices = @transform_0, window_bounds = array<i64: 24, 512>}, {pipeline_mode = #tpu.pipeline_mode<synchronous>, transform_indices = @transform_1, window_bounds = array<i64: 512, 512>}, {pipeline_mode = #tpu.pipeline_mode<synchronous>, transform_indices = @transform_2, window_bounds = array<i64: 256, 128>}, {transform_indices = @transform_3, window_bounds = array<i64: 24, 128>}]} {
    %c0 = arith.constant 0 : index
    %c0_0 = arith.constant 0 : index
    %0 = vector.load %arg1[%c0, %c0_0] : memref<24x512xf32, #tpu.memory_space<vmem>>, vector<24x512xf32>
    %c0_1 = arith.constant 0 : index
    %c0_2 = arith.constant 0 : index
    %1 = vector.load %arg2[%c0_1, %c0_2] : memref<512x512xf32, #tpu.memory_space<vmem>>, vector<512x512xf32>
    %cst = arith.constant dense<0.000000e+00> : vector<24x512xf32>
    %2 = tpu.matmul %0, %1, %cst {dimension_numbers = #tpu.dot_dimension_numbers<[1], [0], [0], [1], [0, 0, 1, 1], [], []>} : vector<24x512xf32>, vector<512x512xf32>, vector<24x512xf32> -> vector<24x512xf32>
    %3 = vector.extract_strided_slice %2 {offsets = [0, 0], sizes = [24, 256], strides = [1, 1]} : vector<24x512xf32> to vector<24x256xf32>
    %4 = vector.extract_strided_slice %2 {offsets = [0, 256], sizes = [24, 256], strides = [1, 1]} : vector<24x512xf32> to vector<24x256xf32>
    %5 = arith.mulf %3, %3 : vector<24x256xf32>
    %6 = arith.mulf %4, %4 : vector<24x256xf32>
    %7 = arith.addf %5, %6 : vector<24x256xf32>
    %cst_3 = arith.constant 9.99999993E-9 : f32
    %cst_4 = arith.constant 1.000000e+08 : f32
    %8 = vector.broadcast %cst_3 : f32 to vector<24x256xf32>
    %9 = arith.maximumf %8, %7 : vector<24x256xf32>
    %10 = vector.broadcast %cst_4 : f32 to vector<24x256xf32>
    %11 = arith.minimumf %10, %9 : vector<24x256xf32>
    %c0_5 = arith.constant 0 : index
    %c0_6 = arith.constant 0 : index
    %12 = vector.load %arg3[%c0_5, %c0_6] : memref<256x128xf32, #tpu.memory_space<vmem>>, vector<256x128xf32>
    %cst_7 = arith.constant dense<0.000000e+00> : vector<24x128xf32>
    %13 = tpu.matmul %11, %12, %cst_7 {dimension_numbers = #tpu.dot_dimension_numbers<[1], [0], [0], [1], [0, 0, 1, 1], [], []>} : vector<24x256xf32>, vector<256x128xf32>, vector<24x128xf32> -> vector<24x128xf32>
    %cst_8 = arith.constant 9.99999993E-9 : f32
    %cst_9 = arith.constant 1.000000e+08 : f32
    %14 = vector.broadcast %cst_8 : f32 to vector<24x128xf32>
    %15 = arith.maximumf %14, %13 : vector<24x128xf32>
    %16 = vector.broadcast %cst_9 : f32 to vector<24x128xf32>
    %17 = arith.minimumf %16, %15 : vector<24x128xf32>
    %cst_10 = arith.constant 9.99999993E-9 : f32
    %18 = vector.broadcast %cst_10 : f32 to vector<24x128xf32>
    %19 = arith.addf %17, %18 : vector<24x128xf32>
    %20 = math.log %19 : vector<24x128xf32>
    %c0_11 = arith.constant 0 : index
    %c0_12 = arith.constant 0 : index
    %21 = vector.load %arg4[%c0_11, %c0_12] : memref<24x128xf32, #tpu.memory_space<vmem>>, vector<24x128xf32>
    tpu.vector_store %arg4[%c0_11, %c0_12], %20 {strides = array<i32>} : memref<24x128xf32, #tpu.memory_space<vmem>>, vector<24x128xf32>,
    return
  }
  func.func @transform_0(%arg0: i32) -> (i32, i32) {
    %c0_i32 = arith.constant 0 : i32
    %c0_i32_0 = arith.constant 0 : i32
    return %arg0, %c0_i32 : i32, i32
  }
  func.func @transform_1(%arg0: i32) -> (i32, i32) {
    %c0_i32 = arith.constant 0 : i32
    %c0_i32_0 = arith.constant 0 : i32
    %c0_i32_1 = arith.constant 0 : i32
    return %c0_i32, %c0_i32_0 : i32, i32
  }
  func.func @transform_2(%arg0: i32) -> (i32, i32) {
    %c0_i32 = arith.constant 0 : i32
    %c0_i32_0 = arith.constant 0 : i32
    %c0_i32_1 = arith.constant 0 : i32
    return %c0_i32, %c0_i32_0 : i32, i32
  }
  func.func @transform_3(%arg0: i32) -> (i32, i32) {
    %c0_i32 = arith.constant 0 : i32
    %c0_i32_0 = arith.constant 0 : i32
    return %arg0, %c0_i32 : i32, i32
  }
}

</mosaic_0001>

<llo_original>
// kernel: tf_melbanks.1
$region0: #{tf_melbanks.1}
  #allocation0 [shape = 'u32[]', space=smem, size = 0x4, offset = 0x4, fixed_abs, tag = 'smem constant byte address 0x4 - core index']
  #allocation1 [shape = 'u32[144,128]{1,0:T(1,128)}', space=vmem, size = 0x12000, scoped, tag = 'internal scratch']
  %s0 = inlined_call_operand.vmem [shape: f32[24,512], index: 0, kind: input, shape index: {}]
  %s1 = inlined_call_operand.hbm [shape: f32[512,512], index: 1, kind: input, shape index: {}]
  %s2 = inlined_call_operand.vmem [shape: f32[256,128], index: 2, kind: input, shape index: {}]
  %s3 = inlined_call_operand.vmem [shape: f32[24,128], index: 3, kind: output, shape index: {}]
  %s4 = sld [smem:[#allocation0]]
  $region26: #{tf_melbanks.1} parent=0
    _
  %s6 = ssub.s32 1, %s4
  %s7 = scalar_select 0, %s6, %s4
  $region1: #{tf_melbanks.1} parent=0
    #allocation2 [shape = 'u8[1048576]{0}', space=vmem, size = 0x100000, scoped, tag = 'input window, operand 1, single buffered']
    #allocation3 [shape = 's32[1]{0}', space=sflag, size = 0x4, scoped, tag = 'scoped memory for tf_melbanks.1']
    %8 = vsyncpa [#allocation3], 0
    // Predicated region
    $region2: #{tf_melbanks.1} parent=1 // pred_check
      _
    $region3: #{tf_melbanks.1} parent=1 // pred_check_branch
      %10 = sbr.rel (0) target = $region5
    $region4: #{tf_melbanks.1} parent=1 // pred_region
      _
    $region5: #{tf_melbanks.1} parent=1 // pred_fallthru
      _
    // Predicated region
    $region6: #{tf_melbanks.1} parent=1 // pred_check
      _
    $region7: #{tf_melbanks.1} parent=1 // pred_check_branch
      %12 = sbr.rel (0) target = $region9
    $region8: #{tf_melbanks.1} parent=1 // pred_region
      %s14 = ssub.s32 32768, 32768
      %15 = vsyncadd [#allocation3], %s14
      %s16 = sshll.u32 [#allocation2], 4
      %s17 = int_to_ptr.vmem [resolvable:$true] %s16
      %22 = dma.hbm_to_vmem [thread:$0]  %s1, 32768, %s17, [#allocation3], 512, 512, 32
    $region9: #{tf_melbanks.1} parent=1 // pred_fallthru
      _
    // Predicated region
    $region10: #{tf_melbanks.1} parent=1 // pred_check
      _
    $region11: #{tf_melbanks.1} parent=1 // pred_check_branch
      %24 = sbr.rel (0) target = $region13
    $region12: #{tf_melbanks.1} parent=1 // pred_region
      _
    $region13: #{tf_melbanks.1} parent=1 // pred_fallthru
      _
    // Predicated region
    $region14: #{tf_melbanks.1} parent=1 // pred_check
      _
    $region15: #{tf_melbanks.1} parent=1 // pred_check_branch
      %26 = sbr.rel (0) target = $region17
    $region16: #{tf_melbanks.1} parent=1 // pred_region
      %27 = dma.done [#allocation3], 32768
    $region17: #{tf_melbanks.1} parent=1 // pred_fallthru
      _
    %v28 = vld [vmem:[%s0] sm:$0xff]
    %v29 = vld [vmem:[%s0 + $0x8] sm:$0xff]
    %v30 = vld [vmem:[%s0 + $0x10] sm:$0xff]
    %v31 = vld [vmem:[%s0 + $0x18] sm:$0xff]
    %v32 = vld [vmem:[%s0 + $0x20] sm:$0xff]
    %v33 = vld [vmem:[%s0 + $0x28] sm:$0xff]
    %v34 = vld [vmem:[%s0 + $0x30] sm:$0xff]
    %v35 = vld [vmem:[%s0 + $0x38] sm:$0xff]
    %v36 = vld [vmem:[%s0 + $0x40] sm:$0xff]
    %v37 = vld [vmem:[%s0 + $0x48] sm:$0xff]
    %v38 = vld [vmem:[%s0 + $0x50] sm:$0xff]
    %v39 = vld [vmem:[%s0 + $0x58] sm:$0xff]
    %v40 = vld [vmem:[#allocation2] sm:$0xff]
    %v41 = vld [vmem:[#allocation2 + $0x8] sm:$0xff]
    %v42 = vld [vmem:[#allocation2 + $0x10] sm:$0xff]
    %v43 = vld [vmem:[#allocation2 + $0x18] sm:$0xff]
    %v44 = vld [vmem:[#allocation2 + $0x20] sm:$0xff]
    %v45 = vld [vmem:[#allocation2 + $0x28] sm:$0xff]
    %v46 = vld [vmem:[#allocation2 + $0x30] sm:$0xff]
    %v47 = vld [vmem:[#allocation2 + $0x38] sm:$0xff]
    %v48 = vld [vmem:[#allocation2 + $0x40] sm:$0xff]
    %v49 = vld [vmem:[#allocation2 + $0x48] sm:$0xff]
    %v50 = vld [vmem:[#allocation2 + $0x50] sm:$0xff]
    %v51 = vld [vmem:[#allocation2 + $0x58] sm:$0xff]
    %v52 = vld [vmem:[#allocation2 + $0x60] sm:$0xff]
    %v53 = vld [vmem:[#allocation2 + $0x68] sm:$0xff]
    %v54 = vld [vmem:[#allocation2 + $0x70] sm:$0xff]
    %v55 = vld [vmem:[#allocation2 + $0x78] sm:$0xff]
    %v56 = vld [vmem:[#allocation2 + $0x80] sm:$0xff]
    %v57 = vld [vmem:[#allocation2 + $0x88] sm:$0xff]
    %v58 = vld [vmem:[#allocation2 + $0x90] sm:$0xff]
    %v59 = vld [vmem:[#allocation2 + $0x98] sm:$0xff]
    %v60 = vld [vmem:[#allocation2 + $0xa0] sm:$0xff]
    %v61 = vld [vmem:[#allocation2 + $0xa8] sm:$0xff]
    %v62 = vld [vmem:[#allocation2 + $0xb0] sm:$0xff]
    %v63 = vld [vmem:[#allocation2 + $0xb8] sm:$0xff]
    %v64 = vld [vmem:[#allocation2 + $0xc0] sm:$0xff]
    %v65 = vld [vmem:[#allocation2 + $0xc8] sm:$0xff]
    %v66 = vld [vmem:[#allocation2 + $0xd0] sm:$0xff]
    %v67 = vld [vmem:[#allocation2 + $0xd8] sm:$0xff]
    %v68 = vld [vmem:[#allocation2 + $0xe0] sm:$0xff]
    %v69 = vld [vmem:[#allocation2 + $0xe8] sm:$0xff]
    %v70 = vld [vmem:[#allocation2 + $0xf0] sm:$0xff]
    %v71 = vld [vmem:[#allocation2 + $0xf8] sm:$0xff]
    %v72 = vld [vmem:[#allocation2 + $0x100] sm:$0xff]
    %v73 = vld [vmem:[#allocation2 + $0x108] sm:$0xff]
    %v74 = vld [vmem:[#allocation2 + $0x110] sm:$0xff]
    %v75 = vld [vmem:[#allocation2 + $0x118] sm:$0xff]
    %v76 = vld [vmem:[#allocation2 + $0x120] sm:$0xff]
    %v77 = vld [vmem:[#allocation2 + $0x128] sm:$0xff]
    %v78 = vld [vmem:[#allocation2 + $0x130] sm:$0xff]
    %v79 = vld [vmem:[#allocation2 + $0x138] sm:$0xff]
    %v80 = vld [vmem:[#allocation2 + $0x140] sm:$0xff]
    %v81 = vld [vmem:[#allocation2 + $0x148] sm:$0xff]
    %v82 = vld [vmem:[#allocation2 + $0x150] sm:$0xff]
    %v83 = vld [vmem:[#allocation2 + $0x158] sm:$0xff]
    %v84 = vld [vmem:[#allocation2 + $0x160] sm:$0xff]
    %v85 = vld [vmem:[#allocation2 + $0x168] sm:$0xff]
    %v86 = vld [vmem:[#allocation2 + $0x170] sm:$0xff]
    %v87 = vld [vmem:[#allocation2 + $0x178] sm:$0xff]
    %v88 = vld [vmem:[#allocation2 + $0x180] sm:$0xff]
    %v89 = vld [vmem:[#allocation2 + $0x188] sm:$0xff]
    %v90 = vld [vmem:[#allocation2 + $0x190] sm:$0xff]
    %v91 = vld [vmem:[#allocation2 + $0x198] sm:$0xff]
    %v92 = vld [vmem:[#allocation2 + $0x1a0] sm:$0xff]
    %v93 = vld [vmem:[#allocation2 + $0x1a8] sm:$0xff]
    %v94 = vld [vmem:[#allocation2 + $0x1b0] sm:$0xff]
    %v95 = vld [vmem:[#allocation2 + $0x1b8] sm:$0xff]
    %v96 = vld [vmem:[#allocation2 + $0x1c0] sm:$0xff]
    %v97 = vld [vmem:[#allocation2 + $0x1c8] sm:$0xff]
    %v98 = vld [vmem:[#allocation2 + $0x1d0] sm:$0xff]
    %v99 = vld [vmem:[#allocation2 + $0x1d8] sm:$0xff]
    %v100 = vld [vmem:[#allocation2 + $0x1e0] sm:$0xff]
    %v101 = vld [vmem:[#allocation2 + $0x1e8] sm:$0xff]
    %v102 = vld [vmem:[#allocation2 + $0x1f0] sm:$0xff]
    %v103 = vld [vmem:[#allocation2 + $0x1f8] sm:$0xff]
    %v104 = vld [vmem:[#allocation2 + $0x200] sm:$0xff]
    %v105 = vld [vmem:[#allocation2 + $0x208] sm:$0xff]
    %v106 = vld [vmem:[#allocation2 + $0x210] sm:$0xff]
    %v107 = vld [vmem:[#allocation2 + $0x218] sm:$0xff]
    %v108 = vld [vmem:[#allocation2 + $0x220] sm:$0xff]
    %v109 = vld [vmem:[#allocation2 + $0x228] sm:$0xff]
    %v110 = vld [vmem:[#allocation2 + $0x230] sm:$0xff]
    %v111 = vld [vmem:[#allocation2 + $0x238] sm:$0xff]
    %v112 = vld [vmem:[#allocation2 + $0x240] sm:$0xff]
    %v113 = vld [vmem:[#allocation2 + $0x248] sm:$0xff]
    %v114 = vld [vmem:[#allocation2 + $0x250] sm:$0xff]
    %v115 = vld [vmem:[#allocation2 + $0x258] sm:$0xff]
    %v116 = vld [vmem:[#allocation2 + $0x260] sm:$0xff]
    %v117 = vld [vmem:[#allocation2 + $0x268] sm:$0xff]
    %v118 = vld [vmem:[#allocation2 + $0x270] sm:$0xff]
    %v119 = vld [vmem:[#allocation2 + $0x278] sm:$0xff]
    %v120 = vld [vmem:[#allocation2 + $0x280] sm:$0xff]
    %v121 = vld [vmem:[#allocation2 + $0x288] sm:$0xff]
    %v122 = vld [vmem:[#allocation2 + $0x290] sm:$0xff]
    %v123 = vld [vmem:[#allocation2 + $0x298] sm:$0xff]
    %v124 = vld [vmem:[#allocation2 + $0x2a0] sm:$0xff]
    %v125 = vld [vmem:[#allocation2 + $0x2a8] sm:$0xff]
    %v126 = vld [vmem:[#allocation2 + $0x2b0] sm:$0xff]
    %v127 = vld [vmem:[#allocation2 + $0x2b8] sm:$0xff]
    %v128 = vld [vmem:[#allocation2 + $0x2c0] sm:$0xff]
    %v129 = vld [vmem:[#allocation2 + $0x2c8] sm:$0xff]
    %v130 = vld [vmem:[#allocation2 + $0x2d0] sm:$0xff]
    %v131 = vld [vmem:[#allocation2 + $0x2d8] sm:$0xff]
    %v132 = vld [vmem:[#allocation2 + $0x2e0] sm:$0xff]
    %v133 = vld [vmem:[#allocation2 + $0x2e8] sm:$0xff]
    %v134 = vld [vmem:[#allocation2 + $0x2f0] sm:$0xff]
    %v135 = vld [vmem:[#allocation2 + $0x2f8] sm:$0xff]
    %v136 = vld [vmem:[#allocation2 + $0x300] sm:$0xff]
    %v137 = vld [vmem:[#allocation2 + $0x308] sm:$0xff]
    %v138 = vld [vmem:[#allocation2 + $0x310] sm:$0xff]
    %v139 = vld [vmem:[#allocation2 + $0x318] sm:$0xff]
    %v140 = vld [vmem:[#allocation2 + $0x320] sm:$0xff]
    %v141 = vld [vmem:[#allocation2 + $0x328] sm:$0xff]
    %v142 = vld [vmem:[#allocation2 + $0x330] sm:$0xff]
    %v143 = vld [vmem:[#allocation2 + $0x338] sm:$0xff]
    %v144 = vld [vmem:[#allocation2 + $0x340] sm:$0xff]
    %v145 = vld [vmem:[#allocation2 + $0x348] sm:$0xff]
    %v146 = vld [vmem:[#allocation2 + $0x350] sm:$0xff]
    %v147 = vld [vmem:[#allocation2 + $0x358] sm:$0xff]
    %v148 = vld [vmem:[#allocation2 + $0x360] sm:$0xff]
    %v149 = vld [vmem:[#allocation2 + $0x368] sm:$0xff]
    %v150 = vld [vmem:[#allocation2 + $0x370] sm:$0xff]
    %v151 = vld [vmem:[#allocation2 + $0x378] sm:$0xff]
    %v152 = vld [vmem:[#allocation2 + $0x380] sm:$0xff]
    %v153 = vld [vmem:[#allocation2 + $0x388] sm:$0xff]
    %v154 = vld [vmem:[#allocation2 + $0x390] sm:$0xff]
    %v155 = vld [vmem:[#allocation2 + $0x398] sm:$0xff]
    %v156 = vld [vmem:[#allocation2 + $0x3a0] sm:$0xff]
    %v157 = vld [vmem:[#allocation2 + $0x3a8] sm:$0xff]
    %v158 = vld [vmem:[#allocation2 + $0x3b0] sm:$0xff]
    %v159 = vld [vmem:[#allocation2 + $0x3b8] sm:$0xff]
    %v160 = vld [vmem:[#allocation2 + $0x3c0] sm:$0xff]
    %v161 = vld [vmem:[#allocation2 + $0x3c8] sm:$0xff]
    %v162 = vld [vmem:[#allocation2 + $0x3d0] sm:$0xff]
    %v163 = vld [vmem:[#allocation2 + $0x3d8] sm:$0xff]
    %v164 = vld [vmem:[#allocation2 + $0x3e0] sm:$0xff]
    %v165 = vld [vmem:[#allocation2 + $0x3e8] sm:$0xff]
    %v166 = vld [vmem:[#allocation2 + $0x3f0] sm:$0xff]
    %v167 = vld [vmem:[#allocation2 + $0x3f8] sm:$0xff]
    %v168 = vld [vmem:[#allocation2 + $0x400] sm:$0xff]
    %v169 = vld [vmem:[#allocation2 + $0x408] sm:$0xff]
    %v170 = vld [vmem:[#allocation2 + $0x410] sm:$0xff]
    %v171 = vld [vmem:[#allocation2 + $0x418] sm:$0xff]
    %v172 = vld [vmem:[#allocation2 + $0x420] sm:$0xff]
    %v173 = vld [vmem:[#allocation2 + $0x428] sm:$0xff]
    %v174 = vld [vmem:[#allocation2 + $0x430] sm:$0xff]
    %v175 = vld [vmem:[#allocation2 + $0x438] sm:$0xff]
    %v176 = vld [vmem:[#allocation2 + $0x440] sm:$0xff]
    %v177 = vld [vmem:[#allocation2 + $0x448] sm:$0xff]
    %v178 = vld [vmem:[#allocation2 + $0x450] sm:$0xff]
    %v179 = vld [vmem:[#allocation2 + $0x458] sm:$0xff]
    %v180 = vld [vmem:[#allocation2 + $0x460] sm:$0xff]
    %v181 = vld [vmem:[#allocation2 + $0x468] sm:$0xff]
    %v182 = vld [vmem:[#allocation2 + $0x470] sm:$0xff]
    %v183 = vld [vmem:[#allocation2 + $0x478] sm:$0xff]
    %v184 = vld [vmem:[#allocation2 + $0x480] sm:$0xff]
    %v185 = vld [vmem:[#allocation2 + $0x488] sm:$0xff]
    %v186 = vld [vmem:[#allocation2 + $0x490] sm:$0xff]
    %v187 = vld [vmem:[#allocation2 + $0x498] sm:$0xff]
    %v188 = vld [vmem:[#allocation2 + $0x4a0] sm:$0xff]
    %v189 = vld [vmem:[#allocation2 + $0x4a8] sm:$0xff]
    %v190 = vld [vmem:[#allocation2 + $0x4b0] sm:$0xff]
    %v191 = vld [vmem:[#allocation2 + $0x4b8] sm:$0xff]
    %v192 = vld [vmem:[#allocation2 + $0x4c0] sm:$0xff]
    %v193 = vld [vmem:[#allocation2 + $0x4c8] sm:$0xff]
    %v194 = vld [vmem:[#allocation2 + $0x4d0] sm:$0xff]
    %v195 = vld [vmem:[#allocation2 + $0x4d8] sm:$0xff]
    %v196 = vld [vmem:[#allocation2 + $0x4e0] sm:$0xff]
    %v197 = vld [vmem:[#allocation2 + $0x4e8] sm:$0xff]
    %v198 = vld [vmem:[#allocation2 + $0x4f0] sm:$0xff]
    %v199 = vld [vmem:[#allocation2 + $0x4f8] sm:$0xff]
    %v200 = vld [vmem:[#allocation2 + $0x500] sm:$0xff]
    %v201 = vld [vmem:[#allocation2 + $0x508] sm:$0xff]
    %v202 = vld [vmem:[#allocation2 + $0x510] sm:$0xff]
    %v203 = vld [vmem:[#allocation2 + $0x518] sm:$0xff]
    %v204 = vld [vmem:[#allocation2 + $0x520] sm:$0xff]
    %v205 = vld [vmem:[#allocation2 + $0x528] sm:$0xff]
    %v206 = vld [vmem:[#allocation2 + $0x530] sm:$0xff]
    %v207 = vld [vmem:[#allocation2 + $0x538] sm:$0xff]
    %v208 = vld [vmem:[#allocation2 + $0x540] sm:$0xff]
    %v209 = vld [vmem:[#allocation2 + $0x548] sm:$0xff]
    %v210 = vld [vmem:[#allocation2 + $0x550] sm:$0xff]
    %v211 = vld [vmem:[#allocation2 + $0x558] sm:$0xff]
    %v212 = vld [vmem:[#allocation2 + $0x560] sm:$0xff]
    %v213 = vld [vmem:[#allocation2 + $0x568] sm:$0xff]
    %v214 = vld [vmem:[#allocation2 + $0x570] sm:$0xff]
    %v215 = vld [vmem:[#allocation2 + $0x578] sm:$0xff]
    %v216 = vld [vmem:[#allocation2 + $0x580] sm:$0xff]
    %v217 = vld [vmem:[#allocation2 + $0x588] sm:$0xff]
    %v218 = vld [vmem:[#allocation2 + $0x590] sm:$0xff]
    %v219 = vld [vmem:[#allocation2 + $0x598] sm:$0xff]
    %v220 = vld [vmem:[#allocation2 + $0x5a0] sm:$0xff]
    %v221 = vld [vmem:[#allocation2 + $0x5a8] sm:$0xff]
    %v222 = vld [vmem:[#allocation2 + $0x5b0] sm:$0xff]
    %v223 = vld [vmem:[#allocation2 + $0x5b8] sm:$0xff]
    %v224 = vld [vmem:[#allocation2 + $0x5c0] sm:$0xff]
    %v225 = vld [vmem:[#allocation2 + $0x5c8] sm:$0xff]
    %v226 = vld [vmem:[#allocation2 + $0x5d0] sm:$0xff]
    %v227 = vld [vmem:[#allocation2 + $0x5d8] sm:$0xff]
    %v228 = vld [vmem:[#allocation2 + $0x5e0] sm:$0xff]
    %v229 = vld [vmem:[#allocation2 + $0x5e8] sm:$0xff]
    %v230 = vld [vmem:[#allocation2 + $0x5f0] sm:$0xff]
    %v231 = vld [vmem:[#allocation2 + $0x5f8] sm:$0xff]
    %v232 = vld [vmem:[#allocation2 + $0x600] sm:$0xff]
    %v233 = vld [vmem:[#allocation2 + $0x608] sm:$0xff]
    %v234 = vld [vmem:[#allocation2 + $0x610] sm:$0xff]
    %v235 = vld [vmem:[#allocation2 + $0x618] sm:$0xff]
    %v236 = vld [vmem:[#allocation2 + $0x620] sm:$0xff]
    %v237 = vld [vmem:[#allocation2 + $0x628] sm:$0xff]
    %v238 = vld [vmem:[#allocation2 + $0x630] sm:$0xff]
    %v239 = vld [vmem:[#allocation2 + $0x638] sm:$0xff]
    %v240 = vld [vmem:[#allocation2 + $0x640] sm:$0xff]
    %v241 = vld [vmem:[#allocation2 + $0x648] sm:$0xff]
    %v242 = vld [vmem:[#allocation2 + $0x650] sm:$0xff]
    %v243 = vld [vmem:[#allocation2 + $0x658] sm:$0xff]
    %v244 = vld [vmem:[#allocation2 + $0x660] sm:$0xff]
    %v245 = vld [vmem:[#allocation2 + $0x668] sm:$0xff]
    %v246 = vld [vmem:[#allocation2 + $0x670] sm:$0xff]
    %v247 = vld [vmem:[#allocation2 + $0x678] sm:$0xff]
    %v248 = vld [vmem:[#allocation2 + $0x680] sm:$0xff]
    %v249 = vld [vmem:[#allocation2 + $0x688] sm:$0xff]
    %v250 = vld [vmem:[#allocation2 + $0x690] sm:$0xff]
    %v251 = vld [vmem:[#allocation2 + $0x698] sm:$0xff]
    %v252 = vld [vmem:[#allocation2 + $0x6a0] sm:$0xff]
    %v253 = vld [vmem:[#allocation2 + $0x6a8] sm:$0xff]
    %v254 = vld [vmem:[#allocation2 + $0x6b0] sm:$0xff]
    %v255 = vld [vmem:[#allocation2 + $0x6b8] sm:$0xff]
    %v256 = vld [vmem:[#allocation2 + $0x6c0] sm:$0xff]
    %v257 = vld [vmem:[#allocation2 + $0x6c8] sm:$0xff]
    %v258 = vld [vmem:[#allocation2 + $0x6d0] sm:$0xff]
    %v259 = vld [vmem:[#allocation2 + $0x6d8] sm:$0xff]
    %v260 = vld [vmem:[#allocation2 + $0x6e0] sm:$0xff]
    %v261 = vld [vmem:[#allocation2 + $0x6e8] sm:$0xff]
    %v262 = vld [vmem:[#allocation2 + $0x6f0] sm:$0xff]
    %v263 = vld [vmem:[#allocation2 + $0x6f8] sm:$0xff]
    %v264 = vld [vmem:[#allocation2 + $0x700] sm:$0xff]
    %v265 = vld [vmem:[#allocation2 + $0x708] sm:$0xff]
    %v266 = vld [vmem:[#allocation2 + $0x710] sm:$0xff]
    %v267 = vld [vmem:[#allocation2 + $0x718] sm:$0xff]
    %v268 = vld [vmem:[#allocation2 + $0x720] sm:$0xff]
    %v269 = vld [vmem:[#allocation2 + $0x728] sm:$0xff]
    %v270 = vld [vmem:[#allocation2 + $0x730] sm:$0xff]
    %v271 = vld [vmem:[#allocation2 + $0x738] sm:$0xff]
    %v272 = vld [vmem:[#allocation2 + $0x740] sm:$0xff]
    %v273 = vld [vmem:[#allocation2 + $0x748] sm:$0xff]
    %v274 = vld [vmem:[#allocation2 + $0x750] sm:$0xff]
    %v275 = vld [vmem:[#allocation2 + $0x758] sm:$0xff]
    %v276 = vld [vmem:[#allocation2 + $0x760] sm:$0xff]
    %v277 = vld [vmem:[#allocation2 + $0x768] sm:$0xff]
    %v278 = vld [vmem:[#allocation2 + $0x770] sm:$0xff]
    %v279 = vld [vmem:[#allocation2 + $0x778] sm:$0xff]
    %v280 = vld [vmem:[#allocation2 + $0x780] sm:$0xff]
    %v281 = vld [vmem:[#allocation2 + $0x788] sm:$0xff]
    %v282 = vld [vmem:[#allocation2 + $0x790] sm:$0xff]
    %v283 = vld [vmem:[#allocation2 + $0x798] sm:$0xff]
    %v284 = vld [vmem:[#allocation2 + $0x7a0] sm:$0xff]
    %v285 = vld [vmem:[#allocation2 + $0x7a8] sm:$0xff]
    %v286 = vld [vmem:[#allocation2 + $0x7b0] sm:$0xff]
    %v287 = vld [vmem:[#allocation2 + $0x7b8] sm:$0xff]
    %v288 = vld [vmem:[#allocation2 + $0x7c0] sm:$0xff]
    %v289 = vld [vmem:[#allocation2 + $0x7c8] sm:$0xff]
    %v290 = vld [vmem:[#allocation2 + $0x7d0] sm:$0xff]
    %v291 = vld [vmem:[#allocation2 + $0x7d8] sm:$0xff]
    %v292 = vld [vmem:[#allocation2 + $0x7e0] sm:$0xff]
    %v293 = vld [vmem:[#allocation2 + $0x7e8] sm:$0xff]
    %v294 = vld [vmem:[#allocation2 + $0x7f0] sm:$0xff]
    %v295 = vld [vmem:[#allocation2 + $0x7f8] sm:$0xff]
    %296 = vmatprep.subr.mxu0 %v41
    %297 = vmatpush1.msra.mxu0 %v40
    %298 = vmatprep.subr.mxu0 %v45
    %299 = vmatpush1.msra.mxu0 %v44
    %300 = vmatprep.subr.mxu0 %v49
    %301 = vmatpush1.msra.mxu0 %v48
    %302 = vmatprep.subr.mxu0 %v53
    %303 = vmatpush1.msra.mxu0 %v52
    %304 = vmatprep.subr.mxu0 %v57
    %305 = vmatpush1.msra.mxu0 %v56
    %306 = vmatprep.subr.mxu0 %v61
    %307 = vmatpush1.msra.mxu0 %v60
    %308 = vmatprep.subr.mxu0 %v65
    %309 = vmatpush1.msra.mxu0 %v64
    %310 = vmatprep.subr.mxu0 %v69
    %311 = vmatpush1.msra.mxu0 %v68
    %312 = vmatprep.subr.mxu0 %v73
    %313 = vmatpush1.msra.mxu0 %v72
    %314 = vmatprep.subr.mxu0 %v77
    %315 = vmatpush1.msra.mxu0 %v76
    %316 = vmatprep.subr.mxu0 %v81
    %317 = vmatpush1.msra.mxu0 %v80
    %318 = vmatprep.subr.mxu0 %v85
    %319 = vmatpush1.msra.mxu0 %v84
    %320 = vmatprep.subr.mxu0 %v89
    %321 = vmatpush1.msra.mxu0 %v88
    %322 = vmatprep.subr.mxu0 %v93
    %323 = vmatpush1.msra.mxu0 %v92
    %324 = vmatprep.subr.mxu0 %v97
    %325 = vmatpush1.msra.mxu0 %v96
    %326 = vmatprep.subr.mxu0 %v101
    %327 = vmatpush1.msra.mxu0 %v100
    %328 = vmatprep.subr.mxu0 %v105
    %329 = vmatpush1.msra.mxu0 %v104
    %330 = vmatprep.subr.mxu0 %v109
    %331 = vmatpush1.msra.mxu0 %v108
    %332 = vmatprep.subr.mxu0 %v113
    %333 = vmatpush1.msra.mxu0 %v112
    %334 = vmatprep.subr.mxu0 %v117
    %335 = vmatpush1.msra.mxu0 %v116
    %336 = vmatprep.subr.mxu0 %v121
    %337 = vmatpush1.msra.mxu0 %v120
    %338 = vmatprep.subr.mxu0 %v125
    %339 = vmatpush1.msra.mxu0 %v124
    %340 = vmatprep.subr.mxu0 %v129
    %341 = vmatpush1.msra.mxu0 %v128
    %342 = vmatprep.subr.mxu0 %v133
    %343 = vmatpush1.msra.mxu0 %v132
    %344 = vmatprep.subr.mxu0 %v137
    %345 = vmatpush1.msra.mxu0 %v136
    %346 = vmatprep.subr.mxu0 %v141
    %347 = vmatpush1.msra.mxu0 %v140
    %348 = vmatprep.subr.mxu0 %v145
    %349 = vmatpush1.msra.mxu0 %v144
    %350 = vmatprep.subr.mxu0 %v149
    %351 = vmatpush1.msra.mxu0 %v148
    %352 = vmatprep.subr.mxu0 %v153
    %353 = vmatpush1.msra.mxu0 %v152
    %354 = vmatprep.subr.mxu0 %v157
    %355 = vmatpush1.msra.mxu0 %v156
    %356 = vmatprep.subr.mxu0 %v161
    %357 = vmatpush1.msra.mxu0 %v160
    %358 = vmatprep.subr.mxu0 %v165
    %359 = vmatpush1.msra.mxu0 %v164
    %360 = vmatprep.mubr.f32.mxu0 %v29
    %361 = vmatmul.mubr.f32.gmra.mrb[0].mxu0 %v28
    %v362 = vpop.f32.mrb[0].mxu0
    %v363 = vadd.f32 0.0, %v362
    %v364 = vpop.f32.mrb[0].mxu0
    %v365 = vadd.f32 0.0, %v364
    %366 = vmatprep.mubr.f32.mxu0 %v33
    %367 = vmatmul.mubr.f32.gmra.mrb[0].mxu0 %v32
    %v368 = vpop.f32.mrb[0].mxu0
    %v369 = vadd.f32 0.0, %v368
    %v370 = vpop.f32.mrb[0].mxu0
    %v371 = vadd.f32 0.0, %v370
    %372 = vmatprep.mubr.f32.mxu0 %v37
    %373 = vmatmul.mubr.f32.gmra.mrb[0].mxu0 %v36
    %v374 = vpop.f32.mrb[0].mxu0
    %v375 = vadd.f32 0.0, %v374
    %v376 = vpop.f32.mrb[0].mxu0
    %v377 = vadd.f32 0.0, %v376
    %378 = vdwg.mxu0
    %379 = vmatprep.subr.mxu0 %v169
    %380 = vmatpush1.msra.mxu0 %v168
    %381 = vmatprep.subr.mxu0 %v173
    %382 = vmatpush1.msra.mxu0 %v172
    %383 = vmatprep.subr.mxu0 %v177
    %384 = vmatpush1.msra.mxu0 %v176
    %385 = vmatprep.subr.mxu0 %v181
    %386 = vmatpush1.msra.mxu0 %v180
    %387 = vmatprep.subr.mxu0 %v185
    %388 = vmatpush1.msra.mxu0 %v184
    %389 = vmatprep.subr.mxu0 %v189
    %390 = vmatpush1.msra.mxu0 %v188
    %391 = vmatprep.subr.mxu0 %v193
    %392 = vmatpush1.msra.mxu0 %v192
    %393 = vmatprep.subr.mxu0 %v197
    %394 = vmatpush1.msra.mxu0 %v196
    %395 = vmatprep.subr.mxu0 %v201
    %396 = vmatpush1.msra.mxu0 %v200
    %397 = vmatprep.subr.mxu0 %v205
    %398 = vmatpush1.msra.mxu0 %v204
    %399 = vmatprep.subr.mxu0 %v209
    %400 = vmatpush1.msra.mxu0 %v208
    %401 = vmatprep.subr.mxu0 %v213
    %402 = vmatpush1.msra.mxu0 %v212
    %403 = vmatprep.subr.mxu0 %v217
    %404 = vmatpush1.msra.mxu0 %v216
    %405 = vmatprep.subr.mxu0 %v221
    %406 = vmatpush1.msra.mxu0 %v220
    %407 = vmatprep.subr.mxu0 %v225
    %408 = vmatpush1.msra.mxu0 %v224
    %409 = vmatprep.subr.mxu0 %v229
    %410 = vmatpush1.msra.mxu0 %v228
    %411 = vmatprep.subr.mxu0 %v233
    %412 = vmatpush1.msra.mxu0 %v232
    %413 = vmatprep.subr.mxu0 %v237
    %414 = vmatpush1.msra.mxu0 %v236
    %415 = vmatprep.subr.mxu0 %v241
    %416 = vmatpush1.msra.mxu0 %v240
    %417 = vmatprep.subr.mxu0 %v245
    %418 = vmatpush1.msra.mxu0 %v244
    %419 = vmatprep.subr.mxu0 %v249
    %420 = vmatpush1.msra.mxu0 %v248
    %421 = vmatprep.subr.mxu0 %v253
    %422 = vmatpush1.msra.mxu0 %v252
    %423 = vmatprep.subr.mxu0 %v257
    %424 = vmatpush1.msra.mxu0 %v256
    %425 = vmatprep.subr.mxu0 %v261
    %426 = vmatpush1.msra.mxu0 %v260
    %427 = vmatprep.subr.mxu0 %v265
    %428 = vmatpush1.msra.mxu0 %v264
    %429 = vmatprep.subr.mxu0 %v269
    %430 = vmatpush1.msra.mxu0 %v268
    %431 = vmatprep.subr.mxu0 %v273
    %432 = vmatpush1.msra.mxu0 %v272
    %433 = vmatprep.subr.mxu0 %v277
    %434 = vmatpush1.msra.mxu0 %v276
    %435 = vmatprep.subr.mxu0 %v281
    %436 = vmatpush1.msra.mxu0 %v280
    %437 = vmatprep.subr.mxu0 %v285
    %438 = vmatpush1.msra.mxu0 %v284
    %439 = vmatprep.subr.mxu0 %v289
    %440 = vmatpush1.msra.mxu0 %v288
    %441 = vmatprep.subr.mxu0 %v293
    %442 = vmatpush1.msra.mxu0 %v292
    %443 = vmatprep.mubr.f32.mxu0 %v31
    %444 = vmatmul.mubr.f32.gmra.mrb[0].mxu0 %v30
    %v445 = vpop.f32.mrb[0].mxu0
    %v446 = vadd.f32 %v363, %v445
    %v447 = vpop.f32.mrb[0].mxu0
    %v448 = vadd.f32 %v365, %v447
    %449 = vmatprep.mubr.f32.mxu0 %v35
    %450 = vmatmul.mubr.f32.gmra.mrb[0].mxu0 %v34
    %v451 = vpop.f32.mrb[0].mxu0
    %v452 = vadd.f32 %v369, %v451
    %v453 = vpop.f32.mrb[0].mxu0
    %v454 = vadd.f32 %v371, %v453
    %455 = vmatprep.mubr.f32.mxu0 %v39
    %456 = vmatmul.mubr.f32.gmra.mrb[0].mxu0 %v38
    %v457 = vpop.f32.mrb[0].mxu0
    %v458 = vadd.f32 %v375, %v457
    %v459 = vpop.f32.mrb[0].mxu0
    %v460 = vadd.f32 %v377, %v459
    %461 = vdwg.mxu0
    %462 = vmatprep.subr.mxu0 %v43
    %463 = vmatpush1.msra.mxu0 %v42
    %464 = vmatprep.subr.mxu0 %v47
    %465 = vmatpush1.msra.mxu0 %v46
    %466 = vmatprep.subr.mxu0 %v51
    %467 = vmatpush1.msra.mxu0 %v50
    %468 = vmatprep.subr.mxu0 %v55
    %469 = vmatpush1.msra.mxu0 %v54
    %470 = vmatprep.subr.mxu0 %v59
    %471 = vmatpush1.msra.mxu0 %v58
    %472 = vmatprep.subr.mxu0 %v63
    %473 = vmatpush1.msra.mxu0 %v62
    %474 = vmatprep.subr.mxu0 %v67
    %475 = vmatpush1.msra.mxu0 %v66
    %476 = vmatprep.subr.mxu0 %v71
    %477 = vmatpush1.msra.mxu0 %v70
    %478 = vmatprep.subr.mxu0 %v75
    %479 = vmatpush1.msra.mxu0 %v74
    %480 = vmatprep.subr.mxu0 %v79
    %481 = vmatpush1.msra.mxu0 %v78
    %482 = vmatprep.subr.mxu0 %v83
    %483 = vmatpush1.msra.mxu0 %v82
    %484 = vmatprep.subr.mxu0 %v87
    %485 = vmatpush1.msra.mxu0 %v86
    %486 = vmatprep.subr.mxu0 %v91
    %487 = vmatpush1.msra.mxu0 %v90
    %488 = vmatprep.subr.mxu0 %v95
    %489 = vmatpush1.msra.mxu0 %v94
    %490 = vmatprep.subr.mxu0 %v99
    %491 = vmatpush1.msra.mxu0 %v98
    %492 = vmatprep.subr.mxu0 %v103
    %493 = vmatpush1.msra.mxu0 %v102
    %494 = vmatprep.subr.mxu0 %v107
    %495 = vmatpush1.msra.mxu0 %v106
    %496 = vmatprep.subr.mxu0 %v111
    %497 = vmatpush1.msra.mxu0 %v110
    %498 = vmatprep.subr.mxu0 %v115
    %499 = vmatpush1.msra.mxu0 %v114
    %500 = vmatprep.subr.mxu0 %v119
    %501 = vmatpush1.msra.mxu0 %v118
    %502 = vmatprep.subr.mxu0 %v123
    %503 = vmatpush1.msra.mxu0 %v122
    %504 = vmatprep.subr.mxu0 %v127
    %505 = vmatpush1.msra.mxu0 %v126
    %506 = vmatprep.subr.mxu0 %v131
    %507 = vmatpush1.msra.mxu0 %v130
    %508 = vmatprep.subr.mxu0 %v135
    %509 = vmatpush1.msra.mxu0 %v134
    %510 = vmatprep.subr.mxu0 %v139
    %511 = vmatpush1.msra.mxu0 %v138
    %512 = vmatprep.subr.mxu0 %v143
    %513 = vmatpush1.msra.mxu0 %v142
    %514 = vmatprep.subr.mxu0 %v147
    %515 = vmatpush1.msra.mxu0 %v146
    %516 = vmatprep.subr.mxu0 %v151
    %517 = vmatpush1.msra.mxu0 %v150
    %518 = vmatprep.subr.mxu0 %v155
    %519 = vmatpush1.msra.mxu0 %v154
    %520 = vmatprep.subr.mxu0 %v159
    %521 = vmatpush1.msra.mxu0 %v158
    %522 = vmatprep.subr.mxu0 %v163
    %523 = vmatpush1.msra.mxu0 %v162
    %524 = vmatprep.subr.mxu0 %v167
    %525 = vmatpush1.msra.mxu0 %v166
    %526 = vmatprep.mubr.f32.mxu0 %v29
    %527 = vmatmul.mubr.f32.gmra.mrb[0].mxu0 %v28
    %v528 = vpop.f32.mrb[0].mxu0
    %v529 = vadd.f32 0.0, %v528
    %v530 = vpop.f32.mrb[0].mxu0
    %v531 = vadd.f32 0.0, %v530
    %532 = vmatprep.mubr.f32.mxu0 %v33
    %533 = vmatmul.mubr.f32.gmra.mrb[0].mxu0 %v32
    %v534 = vpop.f32.mrb[0].mxu0
    %v535 = vadd.f32 0.0, %v534
    %v536 = vpop.f32.mrb[0].mxu0
    %v537 = vadd.f32 0.0, %v536
    %538 = vmatprep.mubr.f32.mxu0 %v37
    %539 = vmatmul.mubr.f32.gmra.mrb[0].mxu0 %v36
    %v540 = vpop.f32.mrb[0].mxu0
    %v541 = vadd.f32 0.0, %v540
    %v542 = vpop.f32.mrb[0].mxu0
    %v543 = vadd.f32 0.0, %v542
    %544 = vdwg.mxu0
    %545 = vmatprep.subr.mxu0 %v171
    %546 = vmatpush1.msra.mxu0 %v170
    %547 = vmatprep.subr.mxu0 %v175
    %548 = vmatpush1.msra.mxu0 %v174
    %549 = vmatprep.subr.mxu0 %v179
    %550 = vmatpush1.msra.mxu0 %v178
    %551 = vmatprep.subr.mxu0 %v183
    %552 = vmatpush1.msra.mxu0 %v182
    %553 = vmatprep.subr.mxu0 %v187
    %554 = vmatpush1.msra.mxu0 %v186
    %555 = vmatprep.subr.mxu0 %v191
    %556 = vmatpush1.msra.mxu0 %v190
    %557 = vmatprep.subr.mxu0 %v195
    %558 = vmatpush1.msra.mxu0 %v194
    %559 = vmatprep.subr.mxu0 %v199
    %560 = vmatpush1.msra.mxu0 %v198
    %561 = vmatprep.subr.mxu0 %v203
    %562 = vmatpush1.msra.mxu0 %v202
    %563 = vmatprep.subr.mxu0 %v207
    %564 = vmatpush1.msra.mxu0 %v206
    %565 = vmatprep.subr.mxu0 %v211
    %566 = vmatpush1.msra.mxu0 %v210
    %567 = vmatprep.subr.mxu0 %v215
    %568 = vmatpush1.msra.mxu0 %v214
    %569 = vmatprep.subr.mxu0 %v219
    %570 = vmatpush1.msra.mxu0 %v218
    %571 = vmatprep.subr.mxu0 %v223
    %572 = vmatpush1.msra.mxu0 %v222
    %573 = vmatprep.subr.mxu0 %v227
    %574 = vmatpush1.msra.mxu0 %v226
    %575 = vmatprep.subr.mxu0 %v231
    %576 = vmatpush1.msra.mxu0 %v230
    %577 = vmatprep.subr.mxu0 %v235
    %578 = vmatpush1.msra.mxu0 %v234
    %579 = vmatprep.subr.mxu0 %v239
    %580 = vmatpush1.msra.mxu0 %v238
    %581 = vmatprep.subr.mxu0 %v243
    %582 = vmatpush1.msra.mxu0 %v242
    %583 = vmatprep.subr.mxu0 %v247
    %584 = vmatpush1.msra.mxu0 %v246
    %585 = vmatprep.subr.mxu0 %v251
    %586 = vmatpush1.msra.mxu0 %v250
    %587 = vmatprep.subr.mxu0 %v255
    %588 = vmatpush1.msra.mxu0 %v254
    %589 = vmatprep.subr.mxu0 %v259
    %590 = vmatpush1.msra.mxu0 %v258
    %591 = vmatprep.subr.mxu0 %v263
    %592 = vmatpush1.msra.mxu0 %v262
    %593 = vmatprep.subr.mxu0 %v267
    %594 = vmatpush1.msra.mxu0 %v266
    %595 = vmatprep.subr.mxu0 %v271
    %596 = vmatpush1.msra.mxu0 %v270
    %597 = vmatprep.subr.mxu0 %v275
    %598 = vmatpush1.msra.mxu0 %v274
    %599 = vmatprep.subr.mxu0 %v279
    %600 = vmatpush1.msra.mxu0 %v278
    %601 = vmatprep.subr.mxu0 %v283
    %602 = vmatpush1.msra.mxu0 %v282
    %603 = vmatprep.subr.mxu0 %v287
    %604 = vmatpush1.msra.mxu0 %v286
    %605 = vmatprep.subr.mxu0 %v291
    %606 = vmatpush1.msra.mxu0 %v290
    %607 = vmatprep.subr.mxu0 %v295
    %608 = vmatpush1.msra.mxu0 %v294
    %609 = vmatprep.mubr.f32.mxu0 %v31
    %610 = vmatmul.mubr.f32.gmra.mrb[0].mxu0 %v30
    %v611 = vpop.f32.mrb[0].mxu0
    %v612 = vadd.f32 %v529, %v611
    %v613 = vpop.f32.mrb[0].mxu0
    %v614 = vadd.f32 %v531, %v613
    %615 = vmatprep.mubr.f32.mxu0 %v35
    %616 = vmatmul.mubr.f32.gmra.mrb[0].mxu0 %v34
    %v617 = vpop.f32.mrb[0].mxu0
    %v618 = vadd.f32 %v535, %v617
    %v619 = vpop.f32.mrb[0].mxu0
    %v620 = vadd.f32 %v537, %v619
    %621 = vmatprep.mubr.f32.mxu0 %v39
    %622 = vmatmul.mubr.f32.gmra.mrb[0].mxu0 %v38
    %v623 = vpop.f32.mrb[0].mxu0
    %v624 = vadd.f32 %v541, %v623
    %v625 = vpop.f32.mrb[0].mxu0
    %v626 = vadd.f32 %v543, %v625
    %627 = vdwg.mxu0
    %v628 = vmul.f32 %v446, %v446
    %v629 = vmul.f32 %v448, %v448
    %v630 = vmul.f32 %v452, %v452
    %v631 = vmul.f32 %v454, %v454
    %v632 = vmul.f32 %v458, %v458
    %v633 = vmul.f32 %v460, %v460
    %v634 = vmul.f32 %v612, %v612
    %v635 = vmul.f32 %v614, %v614
    %v636 = vmul.f32 %v618, %v618
    %v637 = vmul.f32 %v620, %v620
    %v638 = vmul.f32 %v624, %v624
    %v639 = vmul.f32 %v626, %v626
    %v640 = vadd.f32 %v628, %v634
    %v641 = vadd.f32 %v629, %v635
    %v642 = vadd.f32 %v630, %v636
    %v643 = vadd.f32 %v631, %v637
    %v644 = vadd.f32 %v632, %v638
    %v645 = vadd.f32 %v633, %v639
    %v646 = vmax.f32 %v640, 1e-08
    %v647 = vmax.f32 %v641, 1e-08
    %v648 = vmax.f32 %v642, 1e-08
    %v649 = vmax.f32 %v643, 1e-08
    %v650 = vmax.f32 %v644, 1e-08
    %v651 = vmax.f32 %v645, 1e-08
    %v652 = vmin.f32 %v646, 1e+08
    %v653 = vmin.f32 %v647, 1e+08
    %v654 = vmin.f32 %v648, 1e+08
    %v655 = vmin.f32 %v649, 1e+08
    %v656 = vmin.f32 %v650, 1e+08
    %v657 = vmin.f32 %v651, 1e+08
    %v658 = vld [vmem:[%s2] sm:$0xff]
    %v659 = vld [vmem:[%s2 + $0x8] sm:$0xff]
    %v660 = vld [vmem:[%s2 + $0x10] sm:$0xff]
    %v661 = vld [vmem:[%s2 + $0x18] sm:$0xff]
    %v662 = vld [vmem:[%s2 + $0x20] sm:$0xff]
    %v663 = vld [vmem:[%s2 + $0x28] sm:$0xff]
    %v664 = vld [vmem:[%s2 + $0x30] sm:$0xff]
    %v665 = vld [vmem:[%s2 + $0x38] sm:$0xff]
    %v666 = vld [vmem:[%s2 + $0x40] sm:$0xff]
    %v667 = vld [vmem:[%s2 + $0x48] sm:$0xff]
    %v668 = vld [vmem:[%s2 + $0x50] sm:$0xff]
    %v669 = vld [vmem:[%s2 + $0x58] sm:$0xff]
    %v670 = vld [vmem:[%s2 + $0x60] sm:$0xff]
    %v671 = vld [vmem:[%s2 + $0x68] sm:$0xff]
    %v672 = vld [vmem:[%s2 + $0x70] sm:$0xff]
    %v673 = vld [vmem:[%s2 + $0x78] sm:$0xff]
    %v674 = vld [vmem:[%s2 + $0x80] sm:$0xff]
    %v675 = vld [vmem:[%s2 + $0x88] sm:$0xff]
    %v676 = vld [vmem:[%s2 + $0x90] sm:$0xff]
    %v677 = vld [vmem:[%s2 + $0x98] sm:$0xff]
    %v678 = vld [vmem:[%s2 + $0xa0] sm:$0xff]
    %v679 = vld [vmem:[%s2 + $0xa8] sm:$0xff]
    %v680 = vld [vmem:[%s2 + $0xb0] sm:$0xff]
    %v681 = vld [vmem:[%s2 + $0xb8] sm:$0xff]
    %v682 = vld [vmem:[%s2 + $0xc0] sm:$0xff]
    %v683 = vld [vmem:[%s2 + $0xc8] sm:$0xff]
    %v684 = vld [vmem:[%s2 + $0xd0] sm:$0xff]
    %v685 = vld [vmem:[%s2 + $0xd8] sm:$0xff]
    %v686 = vld [vmem:[%s2 + $0xe0] sm:$0xff]
    %v687 = vld [vmem:[%s2 + $0xe8] sm:$0xff]
    %v688 = vld [vmem:[%s2 + $0xf0] sm:$0xff]
    %v689 = vld [vmem:[%s2 + $0xf8] sm:$0xff]
    %690 = vmatprep.subr.mxu0 0.0
    %691 = vmatpush1.msra.mxu0 %v658
    %692 = vmatprep.subr.mxu0 0.0
    %693 = vmatpush1.msra.mxu0 %v659
    %694 = vmatprep.subr.mxu0 0.0
    %695 = vmatpush1.msra.mxu0 %v660
    %696 = vmatprep.subr.mxu0 0.0
    %697 = vmatpush1.msra.mxu0 %v661
    %698 = vmatprep.subr.mxu0 0.0
    %699 = vmatpush1.msra.mxu0 %v662
    %700 = vmatprep.subr.mxu0 0.0
    %701 = vmatpush1.msra.mxu0 %v663
    %702 = vmatprep.subr.mxu0 0.0
    %703 = vmatpush1.msra.mxu0 %v664
    %704 = vmatprep.subr.mxu0 0.0
    %705 = vmatpush1.msra.mxu0 %v665
    %706 = vmatprep.subr.mxu0 0.0
    %707 = vmatpush1.msra.mxu0 %v666
    %708 = vmatprep.subr.mxu0 0.0
    %709 = vmatpush1.msra.mxu0 %v667
    %710 = vmatprep.subr.mxu0 0.0
    %711 = vmatpush1.msra.mxu0 %v668
    %712 = vmatprep.subr.mxu0 0.0
    %713 = vmatpush1.msra.mxu0 %v669
    %714 = vmatprep.subr.mxu0 0.0
    %715 = vmatpush1.msra.mxu0 %v670
    %716 = vmatprep.subr.mxu0 0.0
    %717 = vmatpush1.msra.mxu0 %v671
    %718 = vmatprep.subr.mxu0 0.0
    %719 = vmatpush1.msra.mxu0 %v672
    %720 = vmatprep.subr.mxu0 0.0
    %721 = vmatpush1.msra.mxu0 %v673
    %722 = vmatprep.subr.mxu0 0.0
    %723 = vmatpush1.msra.mxu0 %v674
    %724 = vmatprep.subr.mxu0 0.0
    %725 = vmatpush1.msra.mxu0 %v675
    %726 = vmatprep.subr.mxu0 0.0
    %727 = vmatpush1.msra.mxu0 %v676
    %728 = vmatprep.subr.mxu0 0.0
    %729 = vmatpush1.msra.mxu0 %v677
    %730 = vmatprep.subr.mxu0 0.0
    %731 = vmatpush1.msra.mxu0 %v678
    %732 = vmatprep.subr.mxu0 0.0
    %733 = vmatpush1.msra.mxu0 %v679
    %734 = vmatprep.subr.mxu0 0.0
    %735 = vmatpush1.msra.mxu0 %v680
    %736 = vmatprep.subr.mxu0 0.0
    %737 = vmatpush1.msra.mxu0 %v681
    %738 = vmatprep.subr.mxu0 0.0
    %739 = vmatpush1.msra.mxu0 %v682
    %740 = vmatprep.subr.mxu0 0.0
    %741 = vmatpush1.msra.mxu0 %v683
    %742 = vmatprep.subr.mxu0 0.0
    %743 = vmatpush1.msra.mxu0 %v684
    %744 = vmatprep.subr.mxu0 0.0
    %745 = vmatpush1.msra.mxu0 %v685
    %746 = vmatprep.subr.mxu0 0.0
    %747 = vmatpush1.msra.mxu0 %v686
    %748 = vmatprep.subr.mxu0 0.0
    %749 = vmatpush1.msra.mxu0 %v687
    %750 = vmatprep.subr.mxu0 0.0
    %751 = vmatpush1.msra.mxu0 %v688
    %752 = vmatprep.subr.mxu0 0.0
    %753 = vmatpush1.msra.mxu0 %v689
    %754 = vmatprep.mubr.f32.mxu0 %v653
    %755 = vmatmul.mubr.f32.gmra.mrb[0].mxu0 %v652
    %v756 = vpop.f32.mrb[0].mxu0
    %v757 = vadd.f32 0.0, %v756
    %v758 = vpop.f32.mrb[0].mxu0
    %759 = vmatprep.mubr.f32.mxu0 %v655
    %760 = vmatmul.mubr.f32.gmra.mrb[0].mxu0 %v654
    %v761 = vpop.f32.mrb[0].mxu0
    %v762 = vadd.f32 0.0, %v761
    %v763 = vpop.f32.mrb[0].mxu0
    %764 = vmatprep.mubr.f32.mxu0 %v657
    %765 = vmatmul.mubr.f32.gmra.mrb[0].mxu0 %v656
    %v766 = vpop.f32.mrb[0].mxu0
    %v767 = vadd.f32 0.0, %v766
    %v768 = vpop.f32.mrb[0].mxu0
    %769 = vdwg.mxu0
    %v770 = vmax.f32 %v757, 1e-08
    %v771 = vmax.f32 %v762, 1e-08
    %v772 = vmax.f32 %v767, 1e-08
    %v773 = vmin.f32 %v770, 1e+08
    %v774 = vmin.f32 %v771, 1e+08
    %v775 = vmin.f32 %v772, 1e+08
    %v776 = vadd.f32 %v773, 1e-08
    %v777 = vadd.f32 %v774, 1e-08
    %v778 = vadd.f32 %v775, 1e-08
    %v779 = vlog2.pop %v776
    %v780 = vmul.f32 %v779, 0.6931472
    %v781 = vlog2.pop %v777
    %v782 = vmul.f32 %v781, 0.6931472
    %v783 = vlog2.pop %v778
    %v784 = vmul.f32 %v783, 0.6931472
    %785 = vst [vmem:[%s3] sm:$0xff] %v780
    %786 = vst [vmem:[%s3 + $0x8] sm:$0xff] %v782
    %787 = vst [vmem:[%s3 + $0x10] sm:$0xff] %v784
    // Predicated region
    $region18: #{tf_melbanks.1} parent=1 // pred_check
      _
    $region19: #{tf_melbanks.1} parent=1 // pred_check_branch
      %789 = sbr.rel (0) target = $region21
    $region20: #{tf_melbanks.1} parent=1 // pred_region
      _
    $region21: #{tf_melbanks.1} parent=1 // pred_fallthru
      _
    // Predicated region
    $region22: #{tf_melbanks.1} parent=1 // pred_check
      _
    $region23: #{tf_melbanks.1} parent=1 // pred_check_branch
      %791 = sbr.rel (0) target = $region25
    $region24: #{tf_melbanks.1} parent=1 // pred_region
      _
    $region25: #{tf_melbanks.1} parent=1 // pred_fallthru
      _
    %792 = vsyncpa [#allocation3], 1

</llo_original>
